<compile_context>
chip_gen: v6e
topology: v6e:2x2x1
jax: 0.10.0
libtpu: 0.0.40
codegen_flags: <defaults>
</compile_context>

<pallas_src>
import jax
import jax.numpy as jnp
from jax.experimental import pallas as pl
from jax.experimental.pallas import tpu as pltpu


def _round_up(x, m):
    return (x + m - 1) // m * m


def make_cnn3l_kernel(tb, seq_len, kcin, ncc, nc_pad):
    """Fused conv(im2col matmul) + bias + ReLU + pool + FC for one batch tile."""
    valid = 2 * (seq_len // 2)   # MaxPool(2,2) + global max == max over first 2*(L//2)

    def kernel(x_ref, w_ref, b_ref, wfc_ref, bfc_ref, out_ref):
        # x_ref  : (TB*L, max_k*Cin)  bf16   pre-built im2col slab
        # w_ref  : (max_k*Cin, nk*Cout) bf16 fused (zero-padded taps) conv weights
        # b_ref  : (1, nk*Cout)       f32
        # wfc_ref: (nk*Cout, NCpad)   bf16
        # bfc_ref: (1, NCpad)         f32
        # out_ref: (TB, NCpad)        f32
        y = jnp.dot(x_ref[...], w_ref[...],
                    preferred_element_type=jnp.float32)          # (TB*L, nk*Cout)
        y = jnp.maximum(y + b_ref[...], 0.0)                     # bias + ReLU, f32
        y3 = y.reshape(tb, seq_len, ncc)
        feat = jnp.max(y3[:, :valid, :], axis=1)                 # (TB, nk*Cout), f32

        # dropout(p=0.3) is identity in eval mode.
        out = jnp.dot(feat.astype(jnp.bfloat16), wfc_ref[...],
                      preferred_element_type=jnp.float32) + bfc_ref[...]
        out_ref[...] = out.astype(out_ref.dtype)

    return kernel


def cnn3l_forward(x_ids, surface_availability, params, kernel_sizes, batch_tile=None):
    """Glue: embedding gather, concat, im2col slab build; hot path in Pallas."""
    # Branch fusion below assumes odd kernel sizes (every branch has L_out == L).
    # TODO(synk): add a per-branch fallback path for even kernel sizes.
    assert all(k % 2 == 1 for k in kernel_sizes), "fused path assumes odd kernel sizes"

    emb = params["embedding"]                   # (num_categories, E)
    B, L = x_ids.shape
    E = emb.shape[1]
    cin = E + 1
    cout = params["conv_w"][0].shape[0]
    nk = len(kernel_sizes)
    ncc = cout * nk
    num_classes = params["fc_b"].shape[-1]
    nc_pad = _round_up(num_classes, 128)        # lane-dense output slab
    max_k = max(kernel_sizes)
    max_pad = max_k // 2
    kcin = max_k * cin

    # TODO(synk): embedding gather stays in plain JAX (data-dependent gather).
    xe = emb[x_ids]                                                           # (B, L, E)
    xcat = jnp.concatenate(
        [xe, surface_availability[..., None].astype(jnp.float32)], axis=-1)  # (B, L, Cin)

    # Batch tiling: TB rows per grid step. Default targets >= 2 grid steps for
    # large B (v7x second TC), capped so intermediates stay small everywhere.
    if batch_tile is None:
        batch_tile = min(_round_up(max(-(-B // 2), 1), 8), 256)
    tb = batch_tile
    b_pad = _round_up(B, tb)

    # Pad once with max_pad (shared by all branches), then pre-materialize the
    # im2col slab in the wrapper so the kernel LHS is a straight 2-D slab load:
    #   slab[b, t, j*Cin + c] = xp[b, t + j, c],  j in [0, max_k)
    xp = jnp.pad(xcat, ((0, b_pad - B), (max_pad, max_pad), (0, 0)))          # (Bp, L+2p, Cin)
    slab = jnp.concatenate([xp[:, j:j + L, :] for j in range(max_k)], axis=-1)
    slab = slab.reshape(b_pad * L, kcin).astype(jnp.bfloat16)                 # (Bp*L, max_k*Cin)

    # Fused conv weights: per branch, place its k taps at offset (max_pad - k//2)
    # on the max_k tap grid (zeros elsewhere), then concat branches along N.
    w_blocks, b_blocks = [], []
    for i, k in enumerate(kernel_sizes):
        off = max_pad - k // 2
        wk = jnp.transpose(params["conv_w"][i], (2, 1, 0))                    # (k, Cin, Cout)
        wfull = jnp.zeros((max_k, cin, cout), jnp.float32).at[off:off + k].set(wk)
        w_blocks.append(wfull.reshape(kcin, cout))
        b_blocks.append(params["conv_b"][i])
    w_fused = jnp.concatenate(w_blocks, axis=1).astype(jnp.bfloat16)          # (kcin, nk*Cout)
    b_fused = jnp.concatenate(b_blocks).reshape(1, ncc).astype(jnp.float32)   # (1, nk*Cout)

    wfc = (jnp.zeros((ncc, nc_pad), jnp.float32)
           .at[:, :num_classes].set(params["fc_w"].T).astype(jnp.bfloat16))   # (ncc, NCpad)
    bfc = jnp.zeros((1, nc_pad), jnp.float32).at[:, :num_classes].set(params["fc_b"][None])

    kernel = make_cnn3l_kernel(tb, L, kcin, ncc, nc_pad)

    flops = 2 * b_pad * L * kcin * ncc + 2 * b_pad * ncc * nc_pad
    bytes_accessed = (slab.size * 2 + w_fused.size * 2 + b_fused.size * 4
                      + wfc.size * 2 + bfc.size * 4 + b_pad * nc_pad * 4)
    cost = pl.CostEstimate(flops=flops, transcendentals=0,
                           bytes_accessed=bytes_accessed)

    out = pl.pallas_call(
        kernel,
        out_shape=jax.ShapeDtypeStruct((b_pad, nc_pad), jnp.float32),
        grid_spec=pltpu.PrefetchScalarGridSpec(
            num_scalar_prefetch=0,
            grid=(b_pad // tb,),
            in_specs=[
                pl.BlockSpec((tb * L, kcin), lambda b: (b, 0)),
                pl.BlockSpec((kcin, ncc), lambda b: (0, 0)),
                pl.BlockSpec((1, ncc), lambda b: (0, 0)),
                pl.BlockSpec((ncc, nc_pad), lambda b: (0, 0)),
                pl.BlockSpec((1, nc_pad), lambda b: (0, 0)),
            ],
            out_specs=pl.BlockSpec((tb, nc_pad), lambda b: (b, 0)),
        ),
        compiler_params=pltpu.CompilerParams(
            dimension_semantics=("parallel",),     # batch tiles are independent
            vmem_limit_bytes=32 * 1024 * 1024),    # safe for larger batch_tile on v5e too
        cost_estimate=cost,
    )(slab, w_fused, b_fused, wfc, bfc)

    # Padded batch rows / class columns are independent garbage; slice them off.
    return out[:B, :num_classes]


def cnn3l_reference(x_ids, surface_availability, params, kernel_sizes):
    """Pure-JAX f32 reference (mirrors the PyTorch forward in eval mode)."""
    emb = params["embedding"]
    xe = emb[x_ids]
    xcat = jnp.concatenate(
        [xe, surface_availability[..., None].astype(jnp.float32)], axis=-1)  # (B, L, Cin)
    feats = []
    for i, k in enumerate(kernel_sizes):
        pad = k // 2
        w_wio = jnp.transpose(params["conv_w"][i], (2, 1, 0))  # (k, Cin, Cout)
        y = jax.lax.conv_general_dilated(
            xcat, w_wio, window_strides=(1,), padding=[(pad, pad)],
            dimension_numbers=("NWC", "WIO", "NWC"))           # (B, L_out, Cout)
        y = y + params["conv_b"][i][None, None, :]
        y = jnp.maximum(y, 0.0)
        l_out = y.shape[1]
        valid = 2 * (l_out // 2)
        y = y[:, :valid, :].reshape(y.shape[0], valid // 2, 2, y.shape[2]).max(axis=2)
        feats.append(y.max(axis=1))                            # (B, Cout)
    feat = jnp.concatenate(feats, axis=-1)
    return feat @ params["fc_w"].T + params["fc_b"]


def init_params(key, num_categories, embedding_dim, conv_out_channels,
                kernel_sizes, num_classes):
    keys = jax.random.split(key, 2 + 2 * len(kernel_sizes) + 2)
    cin = embedding_dim + 1
    params = {
        "embedding": jax.random.normal(keys[0], (num_categories, embedding_dim),
                                       jnp.float32) * 0.5,
        "conv_w": [],
        "conv_b": [],
    }
    for i, k in enumerate(kernel_sizes):
        params["conv_w"].append(
            jax.random.normal(keys[1 + 2 * i], (conv_out_channels, cin, k),
                              jnp.float32) * 0.1)
        params["conv_b"].append(
            jax.random.normal(keys[2 + 2 * i], (conv_out_channels,),
                              jnp.float32) * 0.1)
    cfeat = conv_out_channels * len(kernel_sizes)
    params["fc_w"] = jax.random.normal(keys[-2], (num_classes, cfeat),
                                       jnp.float32) * 0.1
    params["fc_b"] = jax.random.normal(keys[-1], (num_classes,),
                                       jnp.float32) * 0.1
    return params


if __name__ == "__main__":
    B, L = 2, 16
    num_categories = 20
    embedding_dim = 8
    conv_out_channels = 16
    kernel_sizes = (3, 5, 7)
    num_classes = 4

    key = jax.random.PRNGKey(0)
    k_params, k_ids, k_sa = jax.random.split(key, 3)
    params = init_params(k_params, num_categories, embedding_dim,
                         conv_out_channels, kernel_sizes, num_classes)

    x_ids = jax.random.randint(k_ids, (B, L), 0, num_categories, dtype=jnp.int32)
    surface_availability = jax.random.uniform(k_sa, (B, L), dtype=jnp.float32)

    out = cnn3l_forward(x_ids, surface_availability, params, kernel_sizes)
    out = jax.block_until_ready(out)

    ref = cnn3l_reference(x_ids, surface_availability, params, kernel_sizes)
    assert out.shape == (B, num_classes)
    # bf16 conv / FC operands in the kernel vs. f32 reference -> loose tolerance.
    assert jnp.allclose(out, ref, atol=2e-2, rtol=2e-2), (out, ref)

    print("KERNEL_OK")
</pallas_src>

<mosaic_0001>
module attributes {stable_mosaic.version = 11 : i64} {
  func.func @kernel(%arg0: i32, %arg1: memref<128x63xbf16, #tpu.memory_space<vmem>>, %arg2: memref<63x48xbf16, #tpu.memory_space<vmem>>, %arg3: memref<1x48xf32, #tpu.memory_space<vmem>>, %arg4: memref<48x128xbf16, #tpu.memory_space<vmem>>, %arg5: memref<1x128xf32, #tpu.memory_space<vmem>>, %arg6: memref<8x128xf32, #tpu.memory_space<vmem>>) attributes {dimension_semantics = [#tpu.dimension_semantics<parallel>], iteration_bounds = array<i64: 1>, scalar_prefetch = 0 : i64, scratch_operands = 0 : i64, tpu.core_type = #tpu.core_type<tc>, window_params = [{transform_indices = @transform_0, window_bounds = array<i64: 128, 63>}, {pipeline_mode = #tpu.pipeline_mode<synchronous>, transform_indices = @transform_1, window_bounds = array<i64: 63, 48>}, {pipeline_mode = #tpu.pipeline_mode<synchronous>, transform_indices = @transform_2, window_bounds = array<i64: 1, 48>}, {pipeline_mode = #tpu.pipeline_mode<synchronous>, transform_indices = @transform_3, window_bounds = array<i64: 48, 128>}, {pipeline_mode = #tpu.pipeline_mode<synchronous>, transform_indices = @transform_4, window_bounds = array<i64: 1, 128>}, {transform_indices = @transform_5, window_bounds = array<i64: 8, 128>}]} {
    %c0 = arith.constant 0 : index
    %c0_0 = arith.constant 0 : index
    %0 = vector.load %arg1[%c0, %c0_0] : memref<128x63xbf16, #tpu.memory_space<vmem>>, vector<128x63xbf16>
    %c0_1 = arith.constant 0 : index
    %c0_2 = arith.constant 0 : index
    %1 = vector.load %arg2[%c0_1, %c0_2] : memref<63x48xbf16, #tpu.memory_space<vmem>>, vector<63x48xbf16>
    %cst = arith.constant dense<0.000000e+00> : vector<128x48xf32>
    %2 = tpu.matmul %0, %1, %cst {dimension_numbers = #tpu.dot_dimension_numbers<[1], [0], [0], [1], [0, 0, 1, 1], [], []>} : vector<128x63xbf16>, vector<63x48xbf16>, vector<128x48xf32> -> vector<128x48xf32>
    %c0_3 = arith.constant 0 : index
    %c0_4 = arith.constant 0 : index
    %3 = vector.load %arg3[%c0_3, %c0_4] : memref<1x48xf32, #tpu.memory_space<vmem>>, vector<1x48xf32>
    %4 = vector.broadcast %3 : vector<1x48xf32> to vector<128x48xf32>
    %5 = arith.addf %2, %4 : vector<128x48xf32>
    %cst_5 = arith.constant 0.000000e+00 : f32
    %6 = vector.broadcast %cst_5 : f32 to vector<128x48xf32>
    %7 = arith.maximumf %5, %6 : vector<128x48xf32>
    %8 = vector.shape_cast %7 : vector<128x48xf32> to vector<8x16x48xf32>
    %cst_6 = arith.constant dense<0xFF800000> : vector<8x48xf32>
    %9 = vector.multi_reduction <maximumf>, %8, %cst_6 [1] : vector<8x16x48xf32> to vector<8x48xf32>
    %10 = arith.truncf %9 : vector<8x48xf32> to vector<8x48xbf16>
    %c0_7 = arith.constant 0 : index
    %c0_8 = arith.constant 0 : index
    %11 = vector.load %arg4[%c0_7, %c0_8] : memref<48x128xbf16, #tpu.memory_space<vmem>>, vector<48x128xbf16>
    %cst_9 = arith.constant dense<0.000000e+00> : vector<8x128xf32>
    %12 = tpu.matmul %10, %11, %cst_9 {dimension_numbers = #tpu.dot_dimension_numbers<[1], [0], [0], [1], [0, 0, 1, 1], [], []>} : vector<8x48xbf16>, vector<48x128xbf16>, vector<8x128xf32> -> vector<8x128xf32>
    %c0_10 = arith.constant 0 : index
    %c0_11 = arith.constant 0 : index
    %13 = vector.load %arg5[%c0_10, %c0_11] : memref<1x128xf32, #tpu.memory_space<vmem>>, vector<1x128xf32>
    %14 = vector.broadcast %13 : vector<1x128xf32> to vector<8x128xf32>
    %15 = arith.addf %12, %14 : vector<8x128xf32>
    %c0_12 = arith.constant 0 : index
    %c0_13 = arith.constant 0 : index
    %16 = vector.load %arg6[%c0_12, %c0_13] : memref<8x128xf32, #tpu.memory_space<vmem>>, vector<8x128xf32>
    tpu.vector_store %arg6[%c0_12, %c0_13], %15 {strides = array<i32>} : memref<8x128xf32, #tpu.memory_space<vmem>>, vector<8x128xf32>,
    return
  }
  func.func @transform_0(%arg0: i32) -> (i32, i32) {
    %c0_i32 = arith.constant 0 : i32
    %c0_i32_0 = arith.constant 0 : i32
    return %arg0, %c0_i32 : i32, i32
  }
  func.func @transform_1(%arg0: i32) -> (i32, i32) {
    %c0_i32 = arith.constant 0 : i32
    %c0_i32_0 = arith.constant 0 : i32
    %c0_i32_1 = arith.constant 0 : i32
    return %c0_i32, %c0_i32_0 : i32, i32
  }
  func.func @transform_2(%arg0: i32) -> (i32, i32) {
    %c0_i32 = arith.constant 0 : i32
    %c0_i32_0 = arith.constant 0 : i32
    %c0_i32_1 = arith.constant 0 : i32
    return %c0_i32, %c0_i32_0 : i32, i32
  }
  func.func @transform_3(%arg0: i32) -> (i32, i32) {
    %c0_i32 = arith.constant 0 : i32
    %c0_i32_0 = arith.constant 0 : i32
    %c0_i32_1 = arith.constant 0 : i32
    return %c0_i32, %c0_i32_0 : i32, i32
  }
  func.func @transform_4(%arg0: i32) -> (i32, i32) {
    %c0_i32 = arith.constant 0 : i32
    %c0_i32_0 = arith.constant 0 : i32
    %c0_i32_1 = arith.constant 0 : i32
    return %c0_i32, %c0_i32_0 : i32, i32
  }
  func.func @transform_5(%arg0: i32) -> (i32, i32) {
    %c0_i32 = arith.constant 0 : i32
    %c0_i32_0 = arith.constant 0 : i32
    return %arg0, %c0_i32 : i32, i32
  }
}

</mosaic_0001>

<llo_original>
// kernel: tpu_custom_call.1
$region0: #{tpu_custom_call.1}
  #allocation0 [shape = 'u32[]', space=smem, size = 0x4, offset = 0x4, fixed_abs, tag = 'smem constant byte address 0x4 - core index']
  #allocation1 [shape = 'u32[144,128]{1,0:T(1,128)}', space=vmem, size = 0x12000, scoped, tag = 'internal scratch']
  %s0 = inlined_call_operand.vmem [shape: bf16[128,63], index: 0, kind: input, shape index: {}]
  %s1 = inlined_call_operand.vmem [shape: bf16[63,48], index: 1, kind: input, shape index: {}]
  %s2 = inlined_call_operand.vmem [shape: f32[1,48], index: 2, kind: input, shape index: {}]
  %s3 = inlined_call_operand.vmem [shape: bf16[48,128], index: 3, kind: input, shape index: {}]
  %s4 = inlined_call_operand.vmem [shape: f32[1,128], index: 4, kind: input, shape index: {}]
  %s5 = inlined_call_operand.hbm [shape: f32[8,128], index: 5, kind: output, shape index: {}]
  %s6 = sld [smem:[#allocation0]]
  $region30: #{tpu_custom_call.1} parent=0
    _
  %s8 = ssub.s32 1, %s6
  %s9 = scalar_select 0, %s8, %s6
  $region1: #{tpu_custom_call.1} parent=0
    #allocation2 [shape = 'u8[4096]{0}', space=vmem, size = 0x1000, scoped, tag = 'output window, operand 0, single buffered']
    #allocation3 [shape = 's32[1]{0}', space=sflag, size = 0x4, scoped, tag = 'scoped memory for tpu_custom_call.1']
    %10 = vsyncpa [#allocation3], 0
    // Predicated region
    $region2: #{tpu_custom_call.1} parent=1 // pred_check
      _
    $region3: #{tpu_custom_call.1} parent=1 // pred_check_branch
      %12 = sbr.rel (0) target = $region5
    $region4: #{tpu_custom_call.1} parent=1 // pred_region
      _
    $region5: #{tpu_custom_call.1} parent=1 // pred_fallthru
      _
    // Predicated region
    $region6: #{tpu_custom_call.1} parent=1 // pred_check
      _
    $region7: #{tpu_custom_call.1} parent=1 // pred_check_branch
      %14 = sbr.rel (0) target = $region9
    $region8: #{tpu_custom_call.1} parent=1 // pred_region
      _
    $region9: #{tpu_custom_call.1} parent=1 // pred_fallthru
      _
    // Predicated region
    $region10: #{tpu_custom_call.1} parent=1 // pred_check
      _
    $region11: #{tpu_custom_call.1} parent=1 // pred_check_branch
      %16 = sbr.rel (0) target = $region13
    $region12: #{tpu_custom_call.1} parent=1 // pred_region
      _
    $region13: #{tpu_custom_call.1} parent=1 // pred_fallthru
      _
    // Predicated region
    $region14: #{tpu_custom_call.1} parent=1 // pred_check
      _
    $region15: #{tpu_custom_call.1} parent=1 // pred_check_branch
      %18 = sbr.rel (0) target = $region17
    $region16: #{tpu_custom_call.1} parent=1 // pred_region
      _
    $region17: #{tpu_custom_call.1} parent=1 // pred_fallthru
      _
    // Predicated region
    $region18: #{tpu_custom_call.1} parent=1 // pred_check
      _
    $region19: #{tpu_custom_call.1} parent=1 // pred_check_branch
      %20 = sbr.rel (0) target = $region21
    $region20: #{tpu_custom_call.1} parent=1 // pred_region
      _
    $region21: #{tpu_custom_call.1} parent=1 // pred_fallthru
      _
    %v22 = vld [vmem:[%s0] sm:$0xf]
    %v23 = vld [vmem:[%s0 + $0x4] sm:$0xf]
    %v24 = vld [vmem:[%s0 + $0x8] sm:$0xf]
    %v25 = vld [vmem:[%s0 + $0xc] sm:$0xf]
    %v26 = vld [vmem:[%s0 + $0x10] sm:$0xf]
    %v27 = vld [vmem:[%s0 + $0x14] sm:$0xf]
    %v28 = vld [vmem:[%s0 + $0x18] sm:$0xf]
    %v29 = vld [vmem:[%s0 + $0x1c] sm:$0xf]
    %v30 = vld [vmem:[%s0 + $0x20] sm:$0xf]
    %v31 = vld [vmem:[%s0 + $0x24] sm:$0xf]
    %v32 = vld [vmem:[%s0 + $0x28] sm:$0xf]
    %v33 = vld [vmem:[%s0 + $0x2c] sm:$0xf]
    %v34 = vld [vmem:[%s0 + $0x30] sm:$0xf]
    %v35 = vld [vmem:[%s0 + $0x34] sm:$0xf]
    %v36 = vld [vmem:[%s0 + $0x38] sm:$0xf]
    %v37 = vld [vmem:[%s0 + $0x3c] sm:$0xf]
    %v38 = vld [vmem:[%s1] sm:$0xf]
    %v39 = vld [vmem:[%s1 + $0x4] sm:$0xf]
    %v40 = vld [vmem:[%s1 + $0x8] sm:$0xf]
    %v41 = vld [vmem:[%s1 + $0xc] sm:$0xf]
    %v42 = vld [vmem:[%s1 + $0x10] sm:$0xf]
    %v43 = vld [vmem:[%s1 + $0x14] sm:$0xf]
    %v44 = vld [vmem:[%s1 + $0x18] sm:$0xf]
    %v45 = vld [vmem:[%s1 + $0x1c] sm:$0xf]
    %v46 = vld [vmem:[%s2] sm:$0x1]
    %v48 = vlaneseq
    %v49 = vshrl.u32 %v48, 7
    %v50 = vsub.s32 0, %v49
    %v51 = vrot.slane %v46, %v50
    %v69 = vunpack.c.l.b16 %v22
    %v70 = vunpack.c.l.b16 %v23
    %v71 = vunpack.c.l.b16 %v24
    %v72 = vunpack.c.l.b16 %v25
    %v73 = vunpack.c.l.b16 %v26
    %v74 = vunpack.c.l.b16 %v27
    %v75 = vunpack.c.l.b16 %v28
    %v76 = vunpack.c.l.b16 %v29
    %v77 = vunpack.c.l.b16 %v30
    %v78 = vunpack.c.l.b16 %v31
    %v79 = vunpack.c.l.b16 %v32
    %v80 = vunpack.c.l.b16 %v33
    %v81 = vunpack.c.l.b16 %v34
    %v82 = vunpack.c.l.b16 %v35
    %v83 = vunpack.c.l.b16 %v36
    %v84 = vunpack.c.l.b16 %v37
    %v85 = vpack.c.b16 %v70, %v69
    %v86 = vpack.c.b16 %v72, %v71
    %v87 = vpack.c.b16 %v74, %v73
    %v88 = vpack.c.b16 %v76, %v75
    %v89 = vpack.c.b16 %v78, %v77
    %v90 = vpack.c.b16 %v80, %v79
    %v91 = vpack.c.b16 %v82, %v81
    %v92 = vpack.c.b16 %v84, %v83
    %v101 = vunpack.c.l.b16 %v38
    %v102 = vunpack.c.l.b16 %v39
    %v103 = vunpack.c.l.b16 %v40
    %v104 = vunpack.c.l.b16 %v41
    %v105 = vunpack.c.l.b16 %v42
    %v106 = vunpack.c.l.b16 %v43
    %v107 = vunpack.c.l.b16 %v44
    %v108 = vunpack.c.l.b16 %v45
    %v109 = vpack.c.b16 %v102, %v101
    %v110 = vpack.c.b16 %v104, %v103
    %v111 = vpack.c.b16 %v106, %v105
    %v112 = vpack.c.b16 %v108, %v107
    %vm116 = vcmask 515072
    %v118 = vsel %vm116, %v85, 0
    %v121 = vsel %vm116, %v86, 0
    %v124 = vsel %vm116, %v87, 0
    %v127 = vsel %vm116, %v88, 0
    %v130 = vsel %vm116, %v89, 0
    %v133 = vsel %vm116, %v90, 0
    %v136 = vsel %vm116, %v91, 0
    %v139 = vsel %vm116, %v92, 0
    %vm141 = vcmask 1046528
    %vm142 = vcmask 1047552
    %v143 = vsel %vm141, 4294967295, 65535
    %v144 = vsel %vm142, %v143, 0
    %v146 = vand.u32 %v112, %v144
    %148 = vmatprep.subr.bf16.mxu0 0
    %149 = vmatpush1.bf16.msra.mxu0 0
    %150 = vmatprep.subr.bf16.mxu0 0
    %151 = vmatpush1.bf16.msra.mxu0 0
    %152 = vmatprep.subr.bf16.mxu0 0
    %153 = vmatpush1.bf16.msra.mxu0 0
    %154 = vmatprep.subr.bf16.mxu0 0
    %155 = vmatpush1.bf16.msra.mxu0 0
    %156 = vmatprep.subr.bf16.mxu0 0
    %157 = vmatpush1.bf16.msra.mxu0 %v146
    %158 = vmatprep.subr.bf16.mxu0 0
    %159 = vmatpush1.bf16.msra.mxu0 %v111
    %160 = vmatprep.subr.bf16.mxu0 0
    %161 = vmatpush1.bf16.msra.mxu0 %v110
    %162 = vmatprep.subr.bf16.mxu0 0
    %163 = vmatpush1.bf16.msra.mxu0 %v109
    %164 = vmatprep.subr.bf16.mxu0 0
    %165 = vmatpush2.bf16.msra.mxu0 0
    %166 = vmatprep.subr.bf16.mxu0 0
    %167 = vmatpush2.bf16.msra.mxu0 0
    %168 = vmatprep.subr.bf16.mxu0 0
    %169 = vmatpush2.bf16.msra.mxu0 0
    %170 = vmatprep.subr.bf16.mxu0 0
    %171 = vmatpush2.bf16.msra.mxu0 0
    %172 = vmatprep.subr.bf16.mxu0 0
    %173 = vmatpush2.bf16.msra.mxu0 0
    %174 = vmatprep.subr.bf16.mxu0 0
    %175 = vmatpush2.bf16.msra.mxu0 0
    %176 = vmatprep.subr.bf16.mxu0 0
    %177 = vmatpush2.bf16.msra.mxu0 0
    %178 = vmatprep.subr.bf16.mxu0 0
    %179 = vmatpush2.bf16.msra.mxu0 0
    %180 = vmatprep.mubr.bf16.mxu0 0
    %181 = vmatmul.mubr.bf16.gmra.mxu0 %v118
    %v182 = vpop.f32.mrf.mxu0
    %v183 = vadd.f32 %v51, %v182
    %v184 = vpop.f32.mrf.mxu0
    %v185 = vpop.f32.mrf.mxu0
    %v186 = vadd.f32 %v51, %v185
    %v187 = vpop.f32.mrf.mxu0
    %188 = vmatprep.mubr.bf16.mxu0 0
    %189 = vmatmul.mubr.bf16.gmra.mxu0 %v121
    %v190 = vpop.f32.mrf.mxu0
    %v191 = vadd.f32 %v51, %v190
    %v192 = vpop.f32.mrf.mxu0
    %v193 = vpop.f32.mrf.mxu0
    %v194 = vadd.f32 %v51, %v193
    %v195 = vpop.f32.mrf.mxu0
    %196 = vmatprep.mubr.bf16.mxu0 0
    %197 = vmatmul.mubr.bf16.gmra.mxu0 %v124
    %v198 = vpop.f32.mrf.mxu0
    %v199 = vadd.f32 %v51, %v198
    %v200 = vpop.f32.mrf.mxu0
    %v201 = vpop.f32.mrf.mxu0
    %v202 = vadd.f32 %v51, %v201
    %v203 = vpop.f32.mrf.mxu0
    %204 = vmatprep.mubr.bf16.mxu0 0
    %205 = vmatmul.mubr.bf16.gmra.mxu0 %v127
    %v206 = vpop.f32.mrf.mxu0
    %v207 = vadd.f32 %v51, %v206
    %v208 = vpop.f32.mrf.mxu0
    %v209 = vpop.f32.mrf.mxu0
    %v210 = vadd.f32 %v51, %v209
    %v211 = vpop.f32.mrf.mxu0
    %212 = vmatprep.mubr.bf16.mxu0 0
    %213 = vmatmul.mubr.bf16.gmra.mxu0 %v130
    %v214 = vpop.f32.mrf.mxu0
    %v215 = vadd.f32 %v51, %v214
    %v216 = vpop.f32.mrf.mxu0
    %v217 = vpop.f32.mrf.mxu0
    %v218 = vadd.f32 %v51, %v217
    %v219 = vpop.f32.mrf.mxu0
    %220 = vmatprep.mubr.bf16.mxu0 0
    %221 = vmatmul.mubr.bf16.gmra.mxu0 %v133
    %v222 = vpop.f32.mrf.mxu0
    %v223 = vadd.f32 %v51, %v222
    %v224 = vpop.f32.mrf.mxu0
    %v225 = vpop.f32.mrf.mxu0
    %v226 = vadd.f32 %v51, %v225
    %v227 = vpop.f32.mrf.mxu0
    %228 = vmatprep.mubr.bf16.mxu0 0
    %229 = vmatmul.mubr.bf16.gmra.mxu0 %v136
    %v230 = vpop.f32.mrf.mxu0
    %v231 = vadd.f32 %v51, %v230
    %v232 = vpop.f32.mrf.mxu0
    %v233 = vpop.f32.mrf.mxu0
    %v234 = vadd.f32 %v51, %v233
    %v235 = vpop.f32.mrf.mxu0
    %236 = vmatprep.mubr.bf16.mxu0 0
    %237 = vmatmul.mubr.bf16.gmra.mxu0 %v139
    %v238 = vpop.f32.mrf.mxu0
    %v239 = vadd.f32 %v51, %v238
    %v240 = vpop.f32.mrf.mxu0
    %v241 = vpop.f32.mrf.mxu0
    %v242 = vadd.f32 %v51, %v241
    %v243 = vpop.f32.mrf.mxu0
    %244 = vdwg.mxu0
    %v245 = vmax.f32 %v183, 0.0
    %v246 = vmax.f32 %v186, 0.0
    %v247 = vmax.f32 %v191, 0.0
    %v248 = vmax.f32 %v194, 0.0
    %v249 = vmax.f32 %v199, 0.0
    %v250 = vmax.f32 %v202, 0.0
    %v251 = vmax.f32 %v207, 0.0
    %v252 = vmax.f32 %v210, 0.0
    %v253 = vmax.f32 %v215, 0.0
    %v254 = vmax.f32 %v218, 0.0
    %v255 = vmax.f32 %v223, 0.0
    %v256 = vmax.f32 %v226, 0.0
    %v257 = vmax.f32 %v231, 0.0
    %v258 = vmax.f32 %v234, 0.0
    %v259 = vmax.f32 %v239, 0.0
    %v260 = vmax.f32 %v242, 0.0
    %vm261 = vcmask 392192
    %v262 = vsel %vm261, %v245, -inf
    %v263 = vsel %vm261, %v246, -inf
    %v264 = vmax.f32 %v262, %v263
    %v265 = vrot.slane %v264, 4
    %v266 = vmax.f32 %v264, %v265
    %v267 = vrot.slane %v266, 2
    %v268 = vmax.f32 %v266, %v267
    %v269 = vrot.slane %v268, 1
    %v270 = vmax.f32 %v268, %v269
    %v271 = vsel %vm261, %v247, -inf
    %v272 = vsel %vm261, %v248, -inf
    %v273 = vmax.f32 %v271, %v272
    %v274 = vrot.slane %v273, 4
    %v275 = vmax.f32 %v273, %v274
    %v276 = vrot.slane %v275, 2
    %v277 = vmax.f32 %v275, %v276
    %v278 = vrot.slane %v277, 1
    %v279 = vmax.f32 %v277, %v278
    %v280 = vsel %vm261, %v249, -inf
    %v281 = vsel %vm261, %v250, -inf
    %v282 = vmax.f32 %v280, %v281
    %v283 = vrot.slane %v282, 4
    %v284 = vmax.f32 %v282, %v283
    %v285 = vrot.slane %v284, 2
    %v286 = vmax.f32 %v284, %v285
    %v287 = vrot.slane %v286, 1
    %v288 = vmax.f32 %v286, %v287
    %v289 = vsel %vm261, %v251, -inf
    %v290 = vsel %vm261, %v252, -inf
    %v291 = vmax.f32 %v289, %v290
    %v292 = vrot.slane %v291, 4
    %v293 = vmax.f32 %v291, %v292
    %v294 = vrot.slane %v293, 2
    %v295 = vmax.f32 %v293, %v294
    %v296 = vrot.slane %v295, 1
    %v297 = vmax.f32 %v295, %v296
    %v298 = vsel %vm261, %v253, -inf
    %v299 = vsel %vm261, %v254, -inf
    %v300 = vmax.f32 %v298, %v299
    %v301 = vrot.slane %v300, 4
    %v302 = vmax.f32 %v300, %v301
    %v303 = vrot.slane %v302, 2
    %v304 = vmax.f32 %v302, %v303
    %v305 = vrot.slane %v304, 1
    %v306 = vmax.f32 %v304, %v305
    %v307 = vsel %vm261, %v255, -inf
    %v308 = vsel %vm261, %v256, -inf
    %v309 = vmax.f32 %v307, %v308
    %v310 = vrot.slane %v309, 4
    %v311 = vmax.f32 %v309, %v310
    %v312 = vrot.slane %v311, 2
    %v313 = vmax.f32 %v311, %v312
    %v314 = vrot.slane %v313, 1
    %v315 = vmax.f32 %v313, %v314
    %v316 = vsel %vm261, %v257, -inf
    %v317 = vsel %vm261, %v258, -inf
    %v318 = vmax.f32 %v316, %v317
    %v319 = vrot.slane %v318, 4
    %v320 = vmax.f32 %v318, %v319
    %v321 = vrot.slane %v320, 2
    %v322 = vmax.f32 %v320, %v321
    %v323 = vrot.slane %v322, 1
    %v324 = vmax.f32 %v322, %v323
    %v325 = vsel %vm261, %v259, -inf
    %v326 = vsel %vm261, %v260, -inf
    %v327 = vmax.f32 %v325, %v326
    %v328 = vrot.slane %v327, 4
    %v329 = vmax.f32 %v327, %v328
    %v330 = vrot.slane %v329, 2
    %v331 = vmax.f32 %v329, %v330
    %v332 = vrot.slane %v331, 1
    %v333 = vmax.f32 %v331, %v332
    %v334 = vpack.c.bf16 %v270, %v270
    %v335 = vpack.c.bf16 %v279, %v279
    %v336 = vpack.c.bf16 %v288, %v288
    %v337 = vpack.c.bf16 %v297, %v297
    %v338 = vpack.c.bf16 %v306, %v306
    %v339 = vpack.c.bf16 %v315, %v315
    %v340 = vpack.c.bf16 %v324, %v324
    %v341 = vpack.c.bf16 %v333, %v333
    %v342 = vld [vmem:[%s3] sm:$0xf]
    %v343 = vld [vmem:[%s3 + $0x4] sm:$0xf]
    %v344 = vld [vmem:[%s3 + $0x8] sm:$0xf]
    %v345 = vld [vmem:[%s3 + $0xc] sm:$0xf]
    %v346 = vld [vmem:[%s3 + $0x10] sm:$0xf]
    %v347 = vld [vmem:[%s3 + $0x14] sm:$0xf]
    %v348 = vld [vmem:[%s4] sm:$0x1]
    %v350 = vlaneseq
    %v351 = vshrl.u32 %v350, 7
    %v352 = vsub.s32 0, %v351
    %v353 = vrot.slane %v348, %v352
    %v363 = vunpack.c.l.b16 %v334
    %v364 = vunpack.c.l.b16 %v335
    %v365 = vunpack.c.l.b16 %v336
    %v366 = vunpack.c.l.b16 %v337
    %v367 = vunpack.c.l.b16 %v338
    %v368 = vunpack.c.l.b16 %v339
    %v369 = vunpack.c.l.b16 %v340
    %v370 = vunpack.c.l.b16 %v341
    %vm371 = vcmask 1041409
    %v372 = vsel %vm371, %v364, %v363
    %vm373 = vcmask 1042434
    %v374 = vsel %vm373, %v365, %v372
    %vm375 = vcmask 1043459
    %v376 = vsel %vm375, %v366, %v374
    %vm377 = vcmask 1044484
    %v378 = vsel %vm377, %v367, %v376
    %vm379 = vcmask 1045509
    %v380 = vsel %vm379, %v368, %v378
    %vm381 = vcmask 1046534
    %v382 = vsel %vm381, %v369, %v380
    %vm383 = vcmask 1047559
    %v384 = vsel %vm383, %v370, %v382
    %v385 = vpack.c.b16 %v384, %v384
    %v392 = vunpack.c.l.b16 %v342
    %v393 = vunpack.c.l.b16 %v343
    %v394 = vunpack.c.l.b16 %v344
    %v395 = vunpack.c.l.b16 %v345
    %v396 = vunpack.c.l.b16 %v346
    %v397 = vunpack.c.l.b16 %v347
    %v398 = vpack.c.b16 %v393, %v392
    %v399 = vpack.c.b16 %v395, %v394
    %v400 = vpack.c.b16 %v397, %v396
    %v405 = vsel %vm261, %v385, 0
    %407 = vmatprep.subr.bf16.mxu0 0
    %408 = vmatpush1.bf16.msra.mxu0 0
    %409 = vmatprep.subr.bf16.mxu0 0
    %410 = vmatpush1.bf16.msra.mxu0 0
    %411 = vmatprep.subr.bf16.mxu0 0
    %412 = vmatpush1.bf16.msra.mxu0 0
    %413 = vmatprep.subr.bf16.mxu0 0
    %414 = vmatpush1.bf16.msra.mxu0 0
    %415 = vmatprep.subr.bf16.mxu0 0
    %416 = vmatpush1.bf16.msra.mxu0 0
    %417 = vmatprep.subr.bf16.mxu0 0
    %418 = vmatpush1.bf16.msra.mxu0 %v400
    %419 = vmatprep.subr.bf16.mxu0 0
    %420 = vmatpush1.bf16.msra.mxu0 %v399
    %421 = vmatprep.subr.bf16.mxu0 0
    %422 = vmatpush1.bf16.msra.mxu0 %v398
    %423 = vmatprep.subr.bf16.mxu0 0
    %424 = vmatpush2.bf16.msra.mxu0 0
    %425 = vmatprep.subr.bf16.mxu0 0
    %426 = vmatpush2.bf16.msra.mxu0 0
    %427 = vmatprep.subr.bf16.mxu0 0
    %428 = vmatpush2.bf16.msra.mxu0 0
    %429 = vmatprep.subr.bf16.mxu0 0
    %430 = vmatpush2.bf16.msra.mxu0 0
    %431 = vmatprep.subr.bf16.mxu0 0
    %432 = vmatpush2.bf16.msra.mxu0 0
    %433 = vmatprep.subr.bf16.mxu0 0
    %434 = vmatpush2.bf16.msra.mxu0 0
    %435 = vmatprep.subr.bf16.mxu0 0
    %436 = vmatpush2.bf16.msra.mxu0 0
    %437 = vmatprep.subr.bf16.mxu0 0
    %438 = vmatpush2.bf16.msra.mxu0 0
    %439 = vmatprep.mubr.bf16.mxu0 0
    %440 = vmatmul.mubr.bf16.gmra.mxu0 %v405
    %v441 = vpop.f32.mrf.mxu0
    %v442 = vadd.f32 %v353, %v441
    %v443 = vpop.f32.mrf.mxu0
    %v444 = vpop.f32.mrf.mxu0
    %v445 = vpop.f32.mrf.mxu0
    %446 = vdwg.mxu0
    %447 = vst [vmem:[#allocation2] sm:$0xff] %v442
    // Predicated region
    $region22: #{tpu_custom_call.1} parent=1 // pred_check
      _
    $region23: #{tpu_custom_call.1} parent=1 // pred_check_branch
      %449 = sbr.rel (0) target = $region25
    $region24: #{tpu_custom_call.1} parent=1 // pred_region
      %s451 = ssub.s32 128, 128
      %452 = vsyncadd [#allocation3], %s451
      %s454 = sshll.u32 [#allocation2], 4
      %s455 = int_to_ptr.vmem [resolvable:$true] %s454
      %457 = dma.vmem_to_hbm [thread:$0]  %s455, 128, %s5, [#allocation3]
    $region25: #{tpu_custom_call.1} parent=1 // pred_fallthru
      _
    // Predicated region
    $region26: #{tpu_custom_call.1} parent=1 // pred_check
      _
    $region27: #{tpu_custom_call.1} parent=1 // pred_check_branch
      %459 = sbr.rel (0) target = $region29
    $region28: #{tpu_custom_call.1} parent=1 // pred_region
      %460 = dma.done [#allocation3], 128
    $region29: #{tpu_custom_call.1} parent=1 // pred_fallthru
      _
    %461 = vsyncpa [#allocation3], 1

</llo_original>
